<compile_context>
chip_gen: v5e
topology: v5e:2x2
jax: 0.10.0
libtpu: 0.0.40
codegen_flags: <defaults>
</compile_context>

<pallas_src>
import jax
import jax.numpy as jnp
import numpy as np
from jax.experimental import pallas as pl
from jax.experimental.pallas import tpu as pltpu


def _round_up(x: int, m: int) -> int:
    return ((x + m - 1) // m) * m


def _default_row_splits() -> int:
    # Only chips with 2 TensorCores per chip (v7x) benefit from a 2-way leading split;
    # on v5e/v6e it is just a serial loop with extra zero/finalize overhead.
    try:
        if "v7" in jax.devices()[0].device_kind.lower():
            return 2
    except Exception:
        pass
    return 1


def _vmem_budget_bytes() -> int:
    # Generation-aware scoped-VMEM budget: v5e/v6e have 128 MiB physical, v7x only 64 MiB.
    try:
        phys = int(pltpu.get_tpu_info().vmem_capacity_bytes)
    except Exception:
        phys = 64 << 20  # assume the smallest generation (v7x) if the query is unavailable
    return min((phys * 7) // 10, 80 << 20)


def _make_kernel(n_valid_rows: int, tile_n: int, n_row_blocks: int):
    """n_valid_rows: original N.  tile_n: rows per grid step (multiple of 8)."""
    has_tail = (n_valid_rows % tile_n) != 0  # static: only then can any block hold OOB rows

    def kernel(x_ref, t_ref, w_ref, o_ref, acc_ref):
        p = pl.program_id(0)      # row split (maps to the 2 TCs on v7x; size 1 elsewhere)
        k = pl.program_id(1)      # reduction steps within this split
        nk = pl.num_programs(1)

        @pl.when(k == 0)
        def _():
            acc_ref[...] = jnp.zeros_like(acc_ref)

        x = x_ref[...].astype(jnp.float32)      # (tile_n, C) logits
        t = t_ref[...].astype(jnp.float32)      # (tile_n, C) targets

        # Numerically stable BCE-with-logits (matches torch.nn.BCEWithLogitsLoss):
        #   max(x, 0) - x*t + log(1 + exp(-|x|))
        # TODO(synk): on v7x with bf16 inputs, consider a bf16 exp if the bundle dump shows
        # the single EUP slot (exp + log1p) as the binding unit after the VALU trims.
        bce = jnp.maximum(x, 0.0) - x * t + jnp.log1p(jnp.exp(-jnp.abs(x)))

        def accumulate(vals):
            # VPU-only fold of the tile's rows (grouped by 8 sublanes) into (8, C).
            acc_ref[...] += vals.reshape(tile_n // 8, 8, vals.shape[-1]).sum(axis=0)

        if has_tail:
            gb = p * nk + k                      # global row-block index (static layout)

            @pl.when(gb != n_row_blocks - 1)     # interior blocks: no mask work at all
            def _():
                accumulate(bce)

            @pl.when(gb == n_row_blocks - 1)     # only the global tail can hold OOB rows
            def _():
                rows = gb * tile_n + jax.lax.broadcasted_iota(jnp.int32, (tile_n, 1), 0)
                # Keep the select form: OOB rows hold garbage (possibly NaN/Inf); where()
                # selects 0.0 for them regardless, so nothing leaks into the sum.
                accumulate(jnp.where(rows < n_valid_rows, bce, 0.0))
        else:
            accumulate(bce)

        # Finalize once per split: apply the per-class weights to the (8, C) accumulator
        # (vreg-aligned multiply), a single cross-lane/sublane reduce, one full-block store.
        @pl.when(k == nk - 1)
        def _():
            total = jnp.sum(acc_ref[...] * w_ref[...])
            r = jax.lax.broadcasted_iota(jnp.int32, (8, 128), 0)
            c = jax.lax.broadcasted_iota(jnp.int32, (8, 128), 1)
            o_ref[...] = jnp.where((r == 0) & (c == 0), total, 0.0)

    return kernel


def weighted_multilabel_loss(outputs: jax.Array, targets: jax.Array, weights: jax.Array,
                             *, tile_n=None, row_splits=None) -> jax.Array:
    """Weighted multilabel BCE-with-logits loss, mean over all N*C elements."""
    N, C = outputs.shape
    assert targets.shape == (N, C)
    assert weights.shape == (C,)

    # Per-class weights, pre-scaled by 1/C and pre-broadcast to a full (8, C) vreg tile so
    # the finalize multiply is vreg-aligned (no sublane broadcast). The remaining 1/N of the
    # mean is applied to the final scalar.
    w8 = jnp.broadcast_to(weights.astype(jnp.float32).reshape(1, C) * (1.0 / C), (8, C))

    itemsize = jnp.dtype(outputs.dtype).itemsize
    vmem_budget = _vmem_budget_bytes()

    # Row tile: target ~4 MiB of DMA per input block per step (>=85% of HBM roofline per
    # measured tiling data), capped so (2 inputs x 2 pipeline buffers in the input dtype
    # + ~4 f32 temporaries per row) plus the fixed allocations stay inside the VMEM budget.
    per_row_bytes = C * (4 * itemsize + 16)
    fixed_bytes = 4 * C * (2 * 8 + 8) + 2 * 8 * 128 * 4 + (2 << 20)  # weights + acc + out + slack
    avail = vmem_budget - fixed_bytes
    if avail < 8 * per_row_bytes:
        # TODO(synk): add a column-tiling grid axis (block C in multiples of 128) for very
        # wide label spaces instead of bailing out.
        raise NotImplementedError(f"C={C} is too wide for a single column block in VMEM")
    cap_rows = (avail // per_row_bytes) // 8 * 8
    target_rows = max(8, ((4 << 20) // (C * itemsize)) // 8 * 8)
    if tile_n is None:
        tile_n = target_rows
    tile_n = max(8, (min(tile_n, cap_rows, _round_up(N, 8)) // 8) * 8)

    n_row_blocks = pl.cdiv(N, tile_n)
    if row_splits is None:
        row_splits = _default_row_splits()
    # Only split when the blocks divide evenly, so no grid step ever maps to a block that is
    # entirely out of range (the only partial block is the global tail, which is masked).
    if row_splits > 1 and n_row_blocks % row_splits != 0:
        row_splits = 1
    steps = n_row_blocks // row_splits

    row_block = lambda p, k: (p * steps + k, 0)

    out = pl.pallas_call(
        _make_kernel(N, tile_n, n_row_blocks),
        out_shape=jax.ShapeDtypeStruct((row_splits * 8, 128), jnp.float32),
        grid_spec=pltpu.PrefetchScalarGridSpec(
            num_scalar_prefetch=0,
            grid=(row_splits, steps),
            in_specs=[
                pl.BlockSpec((tile_n, C), row_block),         # logits tile (input dtype)
                pl.BlockSpec((tile_n, C), row_block),         # targets tile (input dtype)
                pl.BlockSpec((8, C), lambda p, k: (0, 0)),    # scaled weights (VMEM-resident)
            ],
            out_specs=pl.BlockSpec((8, 128), lambda p, k: (p, 0)),  # per-split partial block
            scratch_shapes=[pltpu.VMEM((8, C), jnp.float32)],       # per-split accumulator
        ),
        # TODO(synk): on v7x, verify the leading "parallel" axis actually shards across the
        # 2 TensorCores; if not, switch it to pltpu.CORE_PARALLEL (or pl.core_map).
        compiler_params=pltpu.CompilerParams(
            dimension_semantics=("parallel", "arbitrary"),
            vmem_limit_bytes=int(vmem_budget),
        ),
    )(outputs, targets, w8)

    # Each split wrote its weighted partial sum (already /C) at element [8*p, 0].
    return out.sum() * (1.0 / N)


if __name__ == "__main__":
    key = jax.random.PRNGKey(0)

    def reference(outputs, targets, weights):
        x = outputs.astype(jnp.float32)
        t = targets.astype(jnp.float32)
        bce = jnp.maximum(x, 0.0) - x * t + jnp.log1p(jnp.exp(-jnp.abs(x)))
        return jnp.mean(bce * weights[None, :].astype(jnp.float32))

    cases = [
        dict(N=16, C=128, tile_n=None, dtype=jnp.float32),   # single full block
        dict(N=13, C=128, tile_n=None, dtype=jnp.float32),   # ragged N -> masked tail, no pad
        dict(N=40, C=128, tile_n=8,    dtype=jnp.float32),   # multi-step reduction grid
        dict(N=48, C=256, tile_n=16,   dtype=jnp.bfloat16),  # bf16 inputs, wider C
    ]
    for cfg in cases:
        k1, k2, k3, key = jax.random.split(key, 4)
        N, C = cfg["N"], cfg["C"]
        outputs = jax.random.normal(k1, (N, C), dtype=jnp.float32).astype(cfg["dtype"])
        targets = (jax.random.uniform(k2, (N, C)) > 0.5).astype(cfg["dtype"])
        weights = jax.random.uniform(k3, (C,), dtype=jnp.float32) + 0.5

        loss = weighted_multilabel_loss(outputs, targets, weights, tile_n=cfg["tile_n"])
        loss = jax.block_until_ready(loss)

        ref = reference(outputs, targets, weights)
        np.testing.assert_allclose(np.asarray(loss), np.asarray(ref), rtol=1e-5, atol=1e-5)

    print("KERNEL_OK")
</pallas_src>

<mosaic_0001>
module attributes {stable_mosaic.version = 11 : i64} {
  func.func @kernel(%arg0: i32, %arg1: i32, %arg2: memref<16x128xf32, #tpu.memory_space<vmem>>, %arg3: memref<16x128xf32, #tpu.memory_space<vmem>>, %arg4: memref<8x128xf32, #tpu.memory_space<vmem>>, %arg5: memref<8x128xf32, #tpu.memory_space<vmem>>, %arg6: memref<8x128xf32, #tpu.memory_space<vmem>>) attributes {dimension_semantics = [#tpu.dimension_semantics<parallel>, #tpu.dimension_semantics<arbitrary>], iteration_bounds = array<i64: 1, 1>, scalar_prefetch = 0 : i64, scratch_operands = 1 : i64, tpu.core_type = #tpu.core_type<tc>, window_params = [{transform_indices = @transform_0, window_bounds = array<i64: 16, 128>}, {transform_indices = @transform_1, window_bounds = array<i64: 16, 128>}, {pipeline_mode = #tpu.pipeline_mode<synchronous>, transform_indices = @transform_2, window_bounds = array<i64: 8, 128>}, {transform_indices = @transform_3, window_bounds = array<i64: 8, 128>}]} {
    %c0_i32 = arith.constant 0 : i32
    %0 = arith.cmpi eq, %arg1, %c0_i32 : i32
    %1 = arith.extui %0 : i1 to i32
    %c0_i32_0 = arith.constant 0 : i32
    %2 = arith.cmpi ne, %1, %c0_i32_0 : i32
    scf.if %2 {
      %cst_12 = arith.constant 0.000000e+00 : f32
      %23 = vector.broadcast %cst_12 : f32 to vector<8x128xf32>
      %c0_13 = arith.constant 0 : index
      %c0_14 = arith.constant 0 : index
      %24 = vector.load %arg6[%c0_13, %c0_14] : memref<8x128xf32, #tpu.memory_space<vmem>>, vector<8x128xf32>
      tpu.vector_store %arg6[%c0_13, %c0_14], %23 {strides = array<i32>} : memref<8x128xf32, #tpu.memory_space<vmem>>, vector<8x128xf32>,
    } else {
    }
    %c0 = arith.constant 0 : index
    %c0_1 = arith.constant 0 : index
    %3 = vector.load %arg2[%c0, %c0_1] : memref<16x128xf32, #tpu.memory_space<vmem>>, vector<16x128xf32>
    %c0_2 = arith.constant 0 : index
    %c0_3 = arith.constant 0 : index
    %4 = vector.load %arg3[%c0_2, %c0_3] : memref<16x128xf32, #tpu.memory_space<vmem>>, vector<16x128xf32>
    %cst = arith.constant 0.000000e+00 : f32
    %5 = vector.broadcast %cst : f32 to vector<16x128xf32>
    %6 = arith.maximumf %3, %5 : vector<16x128xf32>
    %7 = arith.mulf %3, %4 : vector<16x128xf32>
    %8 = arith.subf %6, %7 : vector<16x128xf32>
    %9 = math.absf %3 : vector<16x128xf32>
    %cst_4 = arith.constant 0.000000e+00 : f32
    %10 = vector.broadcast %cst_4 : f32 to vector<16x128xf32>
    %11 = arith.subf %10, %9 : vector<16x128xf32>
    %12 = math.exp %11 : vector<16x128xf32>
    %13 = math.log1p %12 : vector<16x128xf32>
    %14 = arith.addf %8, %13 : vector<16x128xf32>
    %c0_5 = arith.constant 0 : index
    %c0_6 = arith.constant 0 : index
    %15 = vector.load %arg6[%c0_5, %c0_6] : memref<8x128xf32, #tpu.memory_space<vmem>>, vector<8x128xf32>
    %16 = vector.shape_cast %14 : vector<16x128xf32> to vector<2x8x128xf32>
    %cst_7 = arith.constant dense<0.000000e+00> : vector<8x128xf32>
    %17 = vector.multi_reduction <add>, %16, %cst_7 [0] : vector<2x8x128xf32> to vector<8x128xf32>
    %18 = arith.addf %15, %17 : vector<8x128xf32>
    %c0_8 = arith.constant 0 : index
    %c0_9 = arith.constant 0 : index
    %19 = vector.load %arg6[%c0_8, %c0_9] : memref<8x128xf32, #tpu.memory_space<vmem>>, vector<8x128xf32>
    tpu.vector_store %arg6[%c0_8, %c0_9], %18 {strides = array<i32>} : memref<8x128xf32, #tpu.memory_space<vmem>>, vector<8x128xf32>,
    %c0_i32_10 = arith.constant 0 : i32
    %20 = arith.cmpi eq, %arg1, %c0_i32_10 : i32
    %21 = arith.extui %20 : i1 to i32
    %c0_i32_11 = arith.constant 0 : i32
    %22 = arith.cmpi ne, %21, %c0_i32_11 : i32
    scf.if %22 {
      %c0_12 = arith.constant 0 : index
      %c0_13 = arith.constant 0 : index
      %23 = vector.load %arg6[%c0_12, %c0_13] : memref<8x128xf32, #tpu.memory_space<vmem>>, vector<8x128xf32>
      %c0_14 = arith.constant 0 : index
      %c0_15 = arith.constant 0 : index
      %24 = vector.load %arg4[%c0_14, %c0_15] : memref<8x128xf32, #tpu.memory_space<vmem>>, vector<8x128xf32>
      %25 = arith.mulf %23, %24 : vector<8x128xf32>
      %26 = vector.shape_cast %25 : vector<8x128xf32> to vector<1x8x128xf32>
      %cst_16 = arith.constant dense<0.000000e+00> : vector<1xf32>
      %27 = vector.multi_reduction <add>, %26, %cst_16 [1, 2] : vector<1x8x128xf32> to vector<1xf32>
      %28 = vector.shape_cast %27 : vector<1xf32> to vector<1x1x1xf32>
      %29 = vector.extract %28[0, 0, 0] : f32 from vector<1x1x1xf32>
      %30 = tpu.iota {dimensions = array<i32: 0>} : vector<8x128xi32>
      %31 = tpu.iota {dimensions = array<i32: 1>} : vector<8x128xi32>
      %c0_i32_17 = arith.constant 0 : i32
      %32 = vector.broadcast %c0_i32_17 : i32 to vector<8x128xi32>
      %33 = arith.cmpi eq, %30, %32 : vector<8x128xi32>
      %c0_i32_18 = arith.constant 0 : i32
      %34 = vector.broadcast %c0_i32_18 : i32 to vector<8x128xi32>
      %35 = arith.cmpi eq, %31, %34 : vector<8x128xi32>
      %36 = arith.andi %33, %35 : vector<8x128xi1>
      %cst_19 = arith.constant 0.000000e+00 : f32
      %37 = vector.broadcast %29 : f32 to vector<8x128xf32>
      %38 = vector.broadcast %cst_19 : f32 to vector<8x128xf32>
      %39 = arith.select %36, %37, %38 : vector<8x128xi1>, vector<8x128xf32>
      %c0_20 = arith.constant 0 : index
      %c0_21 = arith.constant 0 : index
      %40 = vector.load %arg5[%c0_20, %c0_21] : memref<8x128xf32, #tpu.memory_space<vmem>>, vector<8x128xf32>
      tpu.vector_store %arg5[%c0_20, %c0_21], %39 {strides = array<i32>} : memref<8x128xf32, #tpu.memory_space<vmem>>, vector<8x128xf32>,
    } else {
    }
    return
  }
  func.func @transform_0(%arg0: i32, %arg1: i32) -> (i32, i32) {
    %c1_i32 = arith.constant 1 : i32
    %0 = arith.muli %arg0, %c1_i32 : i32
    %1 = arith.addi %0, %arg1 : i32
    %c0_i32 = arith.constant 0 : i32
    %c0_i32_0 = arith.constant 0 : i32
    return %1, %c0_i32 : i32, i32
  }
  func.func @transform_1(%arg0: i32, %arg1: i32) -> (i32, i32) {
    %c1_i32 = arith.constant 1 : i32
    %0 = arith.muli %arg0, %c1_i32 : i32
    %1 = arith.addi %0, %arg1 : i32
    %c0_i32 = arith.constant 0 : i32
    %c0_i32_0 = arith.constant 0 : i32
    return %1, %c0_i32 : i32, i32
  }
  func.func @transform_2(%arg0: i32, %arg1: i32) -> (i32, i32) {
    %c0_i32 = arith.constant 0 : i32
    %c0_i32_0 = arith.constant 0 : i32
    %c0_i32_1 = arith.constant 0 : i32
    return %c0_i32, %c0_i32_0 : i32, i32
  }
  func.func @transform_3(%arg0: i32, %arg1: i32) -> (i32, i32) {
    %c0_i32 = arith.constant 0 : i32
    %c0_i32_0 = arith.constant 0 : i32
    return %arg0, %c0_i32 : i32, i32
  }
}

</mosaic_0001>

<llo_original>
// kernel: tpu_custom_call.1
$region0: #{tpu_custom_call.1}
  #allocation0 [shape = 'u32[]', space=smem, size = 0x4, offset = 0x4, fixed_abs, tag = 'smem constant byte address 0x4 - core index']
  #allocation1 [shape = 'u32[72,128]{1,0:T(1,128)}', space=vmem, size = 0x9000, scoped, tag = 'internal scratch']
  #allocation2 [shape = 'f32[8,128]{1,0:T(8,128)}', space=vmem, size = 0x1000, scoped, tag = 'scratch operand']
  %s0 = inlined_call_operand.hbm [shape: f32[16,128], index: 0, kind: input, shape index: {}]
  %s1 = inlined_call_operand.hbm [shape: f32[16,128], index: 1, kind: input, shape index: {}]
  %s2 = inlined_call_operand.hbm [shape: f32[8,128], index: 2, kind: input, shape index: {}]
  %s3 = inlined_call_operand.hbm [shape: f32[8,128], index: 3, kind: output, shape index: {}]
  %s4 = sld [smem:[#allocation0]]
  $region42: #{tpu_custom_call.1} parent=0
    _
  %s6 = ssub.s32 1, %s4
  %s7 = scalar_select 0, %s6, %s4
  $region1: #{tpu_custom_call.1} parent=0
    #allocation3 [shape = 'u8[8192]{0}', space=vmem, size = 0x2000, scoped, tag = 'input window, operand 0, single buffered']
    #allocation4 [shape = 's32[1]{0}', space=sflag, size = 0x4, scoped, tag = 'scoped memory for tpu_custom_call.1']
    #allocation5 [shape = 's32[1]{0}', space=sflag, size = 0x4, scoped, tag = 'scoped memory for tpu_custom_call.1']
    #allocation6 [shape = 'u8[8192]{0}', space=vmem, size = 0x2000, scoped, tag = 'input window, operand 1, single buffered']
    #allocation7 [shape = 's32[1]{0}', space=sflag, size = 0x4, scoped, tag = 'scoped memory for tpu_custom_call.1']
    #allocation8 [shape = 'u8[4096]{0}', space=vmem, size = 0x1000, scoped, tag = 'input window, operand 2, single buffered']
    #allocation9 [shape = 'u8[4096]{0}', space=vmem, size = 0x1000, scoped, tag = 'output window, operand 0, single buffered']
    %8 = vsyncpa [#allocation4], 0
    %9 = vsyncpa [#allocation7], 0
    %10 = vsyncpa [#allocation5], 0
    // Predicated region
    $region2: #{tpu_custom_call.1} parent=1 // pred_check
      _
    $region3: #{tpu_custom_call.1} parent=1 // pred_check_branch
      %12 = sbr.rel (0) target = $region5
    $region4: #{tpu_custom_call.1} parent=1 // pred_region
      %s13 = sadd.s32 0, 0
      %s14 = smul.u32 2, %s13
      %16 = vsyncadd [#allocation4], 0
      %s17 = smul.addr %s14, 8
      %s18 = scalar_lea.hbm %s0, %s17
      %s19 = sshll.u32 %s18, 4
      %s20 = int_to_ptr.hbm [resolvable:$true] %s19
      %s21 = sshll.u32 [#allocation3], 4
      %s22 = int_to_ptr.vmem [resolvable:$true] %s21
      %27 = dma.hbm_to_vmem [thread:$0]  %s20, 256, %s22, [#allocation4], 128, 128, 8
    $region5: #{tpu_custom_call.1} parent=1 // pred_fallthru
      _
    // Predicated region
    $region6: #{tpu_custom_call.1} parent=1 // pred_check
      _
    $region7: #{tpu_custom_call.1} parent=1 // pred_check_branch
      %29 = sbr.rel (0) target = $region9
    $region8: #{tpu_custom_call.1} parent=1 // pred_region
      %s30 = sadd.s32 0, 0
      %s31 = smul.u32 2, %s30
      %33 = vsyncadd [#allocation7], 0
      %s34 = smul.addr %s31, 8
      %s35 = scalar_lea.hbm %s1, %s34
      %s36 = sshll.u32 %s35, 4
      %s37 = int_to_ptr.hbm [resolvable:$true] %s36
      %s38 = sshll.u32 [#allocation6], 4
      %s39 = int_to_ptr.vmem [resolvable:$true] %s38
      %44 = dma.hbm_to_vmem [thread:$0]  %s37, 256, %s39, [#allocation7], 128, 128, 8
    $region9: #{tpu_custom_call.1} parent=1 // pred_fallthru
      _
    // Predicated region
    $region10: #{tpu_custom_call.1} parent=1 // pred_check
      _
    $region11: #{tpu_custom_call.1} parent=1 // pred_check_branch
      %46 = sbr.rel (0) target = $region13
    $region12: #{tpu_custom_call.1} parent=1 // pred_region
      %48 = vsyncadd [#allocation7], 0
      %s50 = sshll.u32 %s2, 4
      %s51 = int_to_ptr.hbm [resolvable:$true] %s50
      %s52 = sshll.u32 [#allocation8], 4
      %s53 = int_to_ptr.vmem [resolvable:$true] %s52
      %55 = dma.hbm_to_vmem [thread:$0]  %s51, 128, %s53, [#allocation7]
    $region13: #{tpu_custom_call.1} parent=1 // pred_fallthru
      _
    // Predicated region
    $region14: #{tpu_custom_call.1} parent=1 // pred_check
      _
    $region15: #{tpu_custom_call.1} parent=1 // pred_check_branch
      %57 = sbr.rel (0) target = $region17
    $region16: #{tpu_custom_call.1} parent=1 // pred_region
      %59 = dma.done [#allocation4], 256
    $region17: #{tpu_custom_call.1} parent=1 // pred_fallthru
      _
    // Predicated region
    $region18: #{tpu_custom_call.1} parent=1 // pred_check
      _
    $region19: #{tpu_custom_call.1} parent=1 // pred_check_branch
      %61 = sbr.rel (0) target = $region21
    $region20: #{tpu_custom_call.1} parent=1 // pred_region
      %63 = dma.done [#allocation7], 256
    $region21: #{tpu_custom_call.1} parent=1 // pred_fallthru
      _
    // Predicated region
    $region22: #{tpu_custom_call.1} parent=1 // pred_check
      _
    $region23: #{tpu_custom_call.1} parent=1 // pred_check_branch
      %65 = sbr.rel (0) target = $region25
    $region24: #{tpu_custom_call.1} parent=1 // pred_region
      %67 = dma.done [#allocation7], 128
    $region25: #{tpu_custom_call.1} parent=1 // pred_fallthru
      _
    %s68 = sadd.s32 0, 0
    %s69 = smul.u32 2, %s68
    %s70 = sadd.s32 0, 0
    %s71 = smul.u32 2, %s70
    %p72 = scmp.eq.s32.totalorder 0, 0
    // Predicated region
    $region26: #{tpu_custom_call.1} parent=1 // pred_check
      %p73 = pneg %p72
    $region27: #{tpu_custom_call.1} parent=1 // pred_check_branch
      %75 = sbr.rel (%p73) target = $region29
    $region28: #{tpu_custom_call.1} parent=1 // pred_region
      %76 = vst [vmem:[#allocation2] sm:$0xff] 0.0
    $region29: #{tpu_custom_call.1} parent=1 // pred_fallthru
      _
    %v77 = vld [vmem:[#allocation3] sm:$0xff]
    %v78 = vld [vmem:[#allocation3 + $0x8] sm:$0xff]
    %v79 = vld [vmem:[#allocation6] sm:$0xff]
    %v80 = vld [vmem:[#allocation6 + $0x8] sm:$0xff]
    %v81 = vmax.f32 %v77, 0.0
    %v82 = vmax.f32 %v78, 0.0
    %v83 = vmul.f32 %v77, %v79
    %v84 = vmul.f32 %v78, %v80
    %v85 = vsub.f32 %v81, %v83
    %v86 = vsub.f32 %v82, %v84
    %v87 = vand.u32 2147483647, %v77
    %v88 = vand.u32 2147483647, %v78
    %v89 = vsub.f32 0.0, %v87
    %v90 = vsub.f32 0.0, %v88
    %v91 = vmul.f32 %v89, 1.442695
    %v92 = vpow.pop %v91
    %v93 = vmul.f32 %v90, 1.442695
    %v94 = vpow.pop %v93
    %v95 = vadd.f32 %v92, 1.0
    %v96 = vlog2.pop %v95
    %v97 = vmul.f32 %v96, 0.6931472
    %v98 = vmul.f32 -0.5, %v92
    %v99 = vadd.f32 %v98, 1.0
    %v100 = vmul.f32 %v99, %v92
    %v101 = vand.u32 2147483647, %v92
    %vm102 = vcmp.lt.f32.partialorder %v101, 0.0004427343
    %v103 = vsel %vm102, %v100, %v97
    %v104 = vadd.f32 %v94, 1.0
    %v105 = vlog2.pop %v104
    %v106 = vmul.f32 %v105, 0.6931472
    %v107 = vmul.f32 -0.5, %v94
    %v108 = vadd.f32 %v107, 1.0
    %v109 = vmul.f32 %v108, %v94
    %v110 = vand.u32 2147483647, %v94
    %vm111 = vcmp.lt.f32.partialorder %v110, 0.0004427343
    %v112 = vsel %vm111, %v109, %v106
    %v113 = vadd.f32 %v85, %v103
    %v114 = vadd.f32 %v86, %v112
    %v115 = vld [vmem:[#allocation2] sm:$0xff]
    %v116 = vadd.f32 %v113, %v114
    %v117 = vadd.f32 %v115, %v116
    %118 = vst [vmem:[#allocation2] sm:$0xff] %v117
    // Predicated region
    $region30: #{tpu_custom_call.1} parent=1 // pred_check
      %p119 = pneg %p72
    $region31: #{tpu_custom_call.1} parent=1 // pred_check_branch
      %121 = sbr.rel (%p119) target = $region33
    $region32: #{tpu_custom_call.1} parent=1 // pred_region
      %v122 = vld [vmem:[#allocation2] sm:$0xff]
      %v123 = vld [vmem:[#allocation8] sm:$0xff]
      %v124 = vmul.f32 %v122, %v123
      %125 = vadd.xlane.f32.xlu0 %v124
      %v126 = vpop.xlane.xlu0 %125
      %v127 = vrot.slane %v126, 4
      %v128 = vadd.f32 %v126, %v127
      %v129 = vrot.slane %v128, 2
      %v130 = vadd.f32 %v128, %v129
      %v131 = vrot.slane %v130, 1
      %v132 = vadd.f32 %v130, %v131
      %s133 = vtos %v132
      %v134 = vlaneseq
      %v135 = vshrl.u32 %v134, 7
      %v136 = vlaneseq
      %v137 = vand.u32 %v136, 127
      %vm138 = vcmp.eq.s32.totalorder %v135, 0
      %vm139 = vcmp.eq.s32.totalorder %v137, 0
      %vm140 = vmand %vm138, %vm139
      %v141 = vstv %s133
      %v142 = vsel %vm140, %v141, 0.0
      %143 = vst [vmem:[#allocation9] sm:$0xff] %v142
    $region33: #{tpu_custom_call.1} parent=1 // pred_fallthru
      _
    // Predicated region
    $region34: #{tpu_custom_call.1} parent=1 // pred_check
      _
    $region35: #{tpu_custom_call.1} parent=1 // pred_check_branch
      %145 = sbr.rel (0) target = $region37
    $region36: #{tpu_custom_call.1} parent=1 // pred_region
      %147 = vsyncadd [#allocation5], 0
      %s149 = sshll.u32 [#allocation9], 4
      %s150 = int_to_ptr.vmem [resolvable:$true] %s149
      %s151 = sshll.u32 %s3, 4
      %s152 = int_to_ptr.hbm [resolvable:$true] %s151
      %154 = dma.vmem_to_hbm [thread:$0]  %s150, 128, %s152, [#allocation5]
    $region37: #{tpu_custom_call.1} parent=1 // pred_fallthru
      _
    // Predicated region
    $region38: #{tpu_custom_call.1} parent=1 // pred_check
      _
    $region39: #{tpu_custom_call.1} parent=1 // pred_check_branch
      %156 = sbr.rel (0) target = $region41
    $region40: #{tpu_custom_call.1} parent=1 // pred_region
      %158 = dma.done [#allocation5], 128
    $region41: #{tpu_custom_call.1} parent=1 // pred_fallthru
      _
    %159 = vsyncpa [#allocation4], 1
    %160 = vsyncpa [#allocation7], 1
    %161 = vsyncpa [#allocation5], 1

</llo_original>
